<compile_context>
chip_gen: v7x
topology: tpu7x:2x2x1
jax: 0.10.0
libtpu: 0.0.40
codegen_flags: <defaults>
</compile_context>

<pallas_src>
import functools

import jax
import jax.numpy as jnp
from jax import lax
from jax.experimental import pallas as pl
from jax.experimental.pallas import tpu as pltpu


# --------------------------- fused sin / cos ---------------------------------
# pi/2 = _PIO2_A + _PIO2_B + _PIO2_C; the first two parts have short mantissas
# so k*_PIO2_A and k*_PIO2_B are exact in f32 for the quadrant counts reached
# by |x| up to a few thousand radians (cephes constants, pi/4 scheme * 2).
_TWO_OVER_PI = 0.6366197723675814
_PIO2_A = 1.5703125
_PIO2_B = 4.837512969970703125e-4
_PIO2_C = 7.54978995489188216e-8

# Minimax polynomials on |r| <= pi/4 (cephes sinf / cosf).
_S1, _S2, _S3 = -1.6666654611e-1, 8.3321608736e-3, -1.9515295891e-4
_C1, _C2, _C3 = 4.166664568298827e-2, -1.388731625493765e-3, 2.443315711809948e-5


def _sin_with_quadrant(x, extra_quadrant):
    """sin(x + extra_quadrant * pi/2) with a single shared range reduction.

    extra_quadrant == 0 -> sin(x); extra_quadrant == 1 -> cos(x).  The phase
    shift lives in the integer quadrant, so it is exact at any magnitude.
    """
    k = jnp.floor(x * _TWO_OVER_PI + 0.5)              # nearest quadrant count
    r = x - k * _PIO2_A
    r = r - k * _PIO2_B
    r = r - k * _PIO2_C                                # |r| <= pi/4 (+eps)
    q = k.astype(jnp.int32) + extra_quadrant
    r2 = r * r
    sin_r = ((_S3 * r2 + _S2) * r2 + _S1) * r2 * r + r
    cos_r = ((_C3 * r2 + _C2) * r2 + _C1) * (r2 * r2) - 0.5 * r2 + 1.0
    odd_q = jnp.bitwise_and(q, 1) == 1                 # quadrants 1,3 -> cos poly
    neg_q = jnp.bitwise_and(q, 2) == 2                 # quadrants 2,3 -> negate
    val = jnp.where(odd_q, cos_r, sin_r)
    return jnp.where(neg_q, -val, val)


# ------------------------------- kernels --------------------------------------


def _dpe_packed_kernel(d_ref, fq_ref, o_ref, *, num_frequencies: int, pack: int):
    """Lane-dense path: `pack` consecutive distances per row, pack * 2F = 128.

    d_ref : (rows, pack)      distances
    fq_ref: (1, pack*2F)      per-output-lane frequency ([freq|freq] per element)
    o_ref : (rows, pack*2F)   per-element [sin(F) | cos(F)] blocks, 128 lanes
    """
    F = num_frequencies
    G = 2 * F                                          # output lanes per element
    d = d_ref[...]                                     # (rows, pack)
    rows = d.shape[0]
    # Fan each distance out to its G output lanes; the only cross-lane relayout
    # in the kernel (XLU-side work; the VALU slot is the binding one).
    d_wide = jnp.concatenate(
        [jnp.broadcast_to(d[:, j:j + 1], (rows, G)) for j in range(pack)],
        axis=-1)                                       # (rows, 128)
    ang = d_wide * fq_ref[...]                         # same f32 multiply as ref
    # Per-lane quadrant offset: 0 on sin lanes, 1 on cos lanes.  G divides 128
    # so it is a power of two -> cheap bit mask instead of a modulo.
    lane = lax.broadcasted_iota(jnp.int32, (1, pack * G), 1)
    qoff = (jnp.bitwise_and(lane, G - 1) >= F).astype(jnp.int32)
    o_ref[...] = _sin_with_quadrant(ang, qoff)         # one full-width store


def _dpe_generic_kernel(d_ref, fq_ref, o_ref, *, num_frequencies: int,
                        include_original: bool):
    """Fallback path: one distance per row, any F, optional raw-d column.

    d_ref : (rows, 1), fq_ref: (1, 2F), o_ref: (rows, D) with D = 2F (+1).
    """
    F = num_frequencies
    d = d_ref[...]                                     # (rows, 1)
    rows = d.shape[0]
    d_wide = jnp.broadcast_to(d, (rows, 2 * F))        # single lane-broadcast
    ang = d_wide * fq_ref[...]
    lane = lax.broadcasted_iota(jnp.int32, (1, 2 * F), 1)
    qoff = (lane >= F).astype(jnp.int32)
    pe = _sin_with_quadrant(ang, qoff)                 # (rows, 2F), fused sincos
    off = 1 if include_original else 0
    if include_original:
        o_ref[:, 0:1] = d
    o_ref[:, off:off + 2 * F] = pe


# ------------------------------- wrapper ---------------------------------------


def _choose_tile(total_rows: int, requested: int) -> int:
    """Sublane tile: <= requested, a multiple of 8 unless it spans all rows, and
    small enough to give >= 2 grid steps when there is enough work (v7x has two
    TensorCores; a one-step grid leaves one idle; harmless on v5e/v6e)."""
    t = min(requested, total_rows)
    if total_rows >= 16:
        half = (((total_rows + 1) // 2) + 7) // 8 * 8
        t = min(t, half)
    if t < total_rows:
        t = max(8, (t // 8) * 8)
    return max(1, min(t, total_rows))


def _cost(n, F, D):
    # ~25 VPU flops per output element (shared reduction + both minimax
    # polynomials + quadrant select); no EUP transcendentals are used.
    return pl.CostEstimate(flops=int(25 * n * 2 * F), transcendentals=0,
                           bytes_accessed=int(4 * n + 4 * n * D))


def distance_positional_encoding(d, *, num_frequencies: int = 16,
                                 max_frequency: float = 100.0,
                                 include_original: bool = False,
                                 packed_row_tile: int = 4096,
                                 generic_tile: int = 2048):
    """JAX/Pallas equivalent of DistancePositionalEncoding.forward.

    d: (E,) or (B, E) distances.  Returns (..., D), D = 2F (+1 if include_original).
    """
    d = jnp.asarray(d, dtype=jnp.float32)
    orig_shape = d.shape
    F = int(num_frequencies)
    D = 2 * F + (1 if include_original else 0)
    n = int(d.size)
    if n == 0:
        return jnp.zeros((*orig_shape, D), jnp.float32)

    # Same values as the torch buffer; reused verbatim inside the kernel so the
    # angle multiply is bit-identical to the reference.
    freq = jnp.linspace(1.0, max_frequency, F, dtype=jnp.float32)
    freq_pair = jnp.concatenate([freq, freq])          # [sin lanes | cos lanes]

    two_f = 2 * F
    use_packed = (not include_original) and two_f <= 128 and 128 % two_f == 0
    pack = 128 // two_f if use_packed else 1
    use_packed = use_packed and (n % pack == 0)

    if use_packed:
        n_rows = n // pack
        rt = _choose_tile(n_rows, packed_row_tile)
        fq = jnp.tile(freq_pair, pack)[None, :]        # (1, 128)
        kernel = functools.partial(_dpe_packed_kernel, num_frequencies=F,
                                   pack=pack)
        out = pl.pallas_call(
            kernel,
            out_shape=jax.ShapeDtypeStruct((n_rows, pack * two_f), jnp.float32),
            grid_spec=pltpu.PrefetchScalarGridSpec(
                num_scalar_prefetch=0,
                grid=(pl.cdiv(n_rows, rt),),
                in_specs=[
                    pl.BlockSpec((rt, pack), lambda i: (i, 0)),          # distances
                    pl.BlockSpec((1, pack * two_f), lambda i: (0, 0)),   # freq (resident)
                ],
                out_specs=pl.BlockSpec((rt, pack * two_f), lambda i: (i, 0)),
            ),
            compiler_params=pltpu.CompilerParams(
                dimension_semantics=("parallel",)),
            cost_estimate=_cost(n, F, D),
        )(d.reshape(n_rows, pack), fq)
        # Row-major element order is preserved by this reshape; if XLA ever
        # materializes a copy here, consume the (n_rows, 128) view directly.
        return out.reshape(*orig_shape, D)

    # Generic fallback: include_original, 2F does not divide 128, or ragged n.
    rt = _choose_tile(n, generic_tile)
    fq = freq_pair[None, :]                            # (1, 2F)
    kernel = functools.partial(_dpe_generic_kernel, num_frequencies=F,
                               include_original=include_original)
    out = pl.pallas_call(
        kernel,
        out_shape=jax.ShapeDtypeStruct((n, D), jnp.float32),
        grid_spec=pltpu.PrefetchScalarGridSpec(
            num_scalar_prefetch=0,
            grid=(pl.cdiv(n, rt),),
            in_specs=[
                pl.BlockSpec((rt, 1), lambda i: (i, 0)),
                pl.BlockSpec((1, two_f), lambda i: (0, 0)),
            ],
            out_specs=pl.BlockSpec((rt, D), lambda i: (i, 0)),
        ),
        compiler_params=pltpu.CompilerParams(
            dimension_semantics=("parallel",)),
        cost_estimate=_cost(n, F, D),
    )(d.reshape(n, 1), fq)
    return out.reshape(*orig_shape, D)


# ----------------------------- reference & test --------------------------------


def _reference(d, num_frequencies=16, max_frequency=100.0,
               include_original=False):
    d = jnp.asarray(d, dtype=jnp.float32)
    freq = jnp.linspace(1.0, max_frequency, num_frequencies, dtype=jnp.float32)
    angles = d[..., None] * freq
    pe = jnp.concatenate([jnp.sin(angles), jnp.cos(angles)], axis=-1)
    if include_original:
        pe = jnp.concatenate([d[..., None], pe], axis=-1)
    return pe


if __name__ == "__main__":
    key = jax.random.PRNGKey(0)
    k1, k2, k3 = jax.random.split(key, 3)

    # Case 1: (E,) distances -> packed lane-dense path (D=32, 2 grid steps,
    # ragged last block handled by Pallas block clipping).
    E = 200
    d1 = jax.random.uniform(k1, (E,), jnp.float32, 0.0, 10.0)
    out1 = jax.block_until_ready(distance_positional_encoding(d1))
    ref1 = _reference(d1)
    assert out1.shape == (E, 32), out1.shape
    assert jnp.allclose(out1, ref1, atol=1e-5, rtol=1e-5)

    # Case 2: (B, E) distances, include_original=True -> generic path (D=33).
    B, E2 = 2, 64
    d2 = jax.random.uniform(k2, (B, E2), jnp.float32, 0.0, 10.0)
    out2 = jax.block_until_ready(
        distance_positional_encoding(d2, include_original=True))
    ref2 = _reference(d2, include_original=True)
    assert out2.shape == (B, E2, 33), out2.shape
    assert jnp.allclose(out2, ref2, atol=1e-5, rtol=1e-5)

    # Case 3: edge count not divisible by the lane pack -> generic path, D=32.
    E3 = 37
    d3 = jax.random.uniform(k3, (E3,), jnp.float32, 0.0, 10.0)
    out3 = jax.block_until_ready(distance_positional_encoding(d3))
    ref3 = _reference(d3)
    assert out3.shape == (E3, 32), out3.shape
    assert jnp.allclose(out3, ref3, atol=1e-5, rtol=1e-5)

    print("KERNEL_OK")
</pallas_src>

<mosaic_0001>
module attributes {stable_mosaic.version = 11 : i64} {
  func.func @_dpe_packed_kernel(%arg0: i32, %arg1: memref<32x4xf32, #tpu.memory_space<vmem>>, %arg2: memref<1x128xf32, #tpu.memory_space<vmem>>, %arg3: memref<32x128xf32, #tpu.memory_space<vmem>>) attributes {dimension_semantics = [#tpu.dimension_semantics<parallel>], iteration_bounds = array<i64: 2>, scalar_prefetch = 0 : i64, scratch_operands = 0 : i64, tpu.core_type = #tpu.core_type<tc>, window_params = [{transform_indices = @transform_0, window_bounds = array<i64: 32, 4>}, {pipeline_mode = #tpu.pipeline_mode<synchronous>, transform_indices = @transform_1, window_bounds = array<i64: 1, 128>}, {transform_indices = @transform_2, window_bounds = array<i64: 32, 128>}]} {
    %c0 = arith.constant 0 : index
    %c0_0 = arith.constant 0 : index
    %0 = vector.load %arg1[%c0, %c0_0] : memref<32x4xf32, #tpu.memory_space<vmem>>, vector<32x4xf32>
    %1 = vector.extract_strided_slice %0 {offsets = [0, 0], sizes = [32, 1], strides = [1, 1]} : vector<32x4xf32> to vector<32x1xf32>
    %2 = vector.shape_cast %1 : vector<32x1xf32> to vector<32x1xf32>
    %3 = vector.broadcast %2 : vector<32x1xf32> to vector<32x32xf32>
    %4 = vector.extract_strided_slice %0 {offsets = [0, 1], sizes = [32, 1], strides = [1, 1]} : vector<32x4xf32> to vector<32x1xf32>
    %5 = vector.shape_cast %4 : vector<32x1xf32> to vector<32x1xf32>
    %6 = vector.broadcast %5 : vector<32x1xf32> to vector<32x32xf32>
    %7 = vector.extract_strided_slice %0 {offsets = [0, 2], sizes = [32, 1], strides = [1, 1]} : vector<32x4xf32> to vector<32x1xf32>
    %8 = vector.shape_cast %7 : vector<32x1xf32> to vector<32x1xf32>
    %9 = vector.broadcast %8 : vector<32x1xf32> to vector<32x32xf32>
    %10 = vector.extract_strided_slice %0 {offsets = [0, 3], sizes = [32, 1], strides = [1, 1]} : vector<32x4xf32> to vector<32x1xf32>
    %11 = vector.shape_cast %10 : vector<32x1xf32> to vector<32x1xf32>
    %12 = vector.broadcast %11 : vector<32x1xf32> to vector<32x32xf32>
    %13 = tpu.concatenate %3, %6, %9, %12 in 1 : vector<32x32xf32>, vector<32x32xf32>, vector<32x32xf32>, vector<32x32xf32> -> vector<32x128xf32>
    %c0_1 = arith.constant 0 : index
    %c0_2 = arith.constant 0 : index
    %14 = vector.load %arg2[%c0_1, %c0_2] : memref<1x128xf32, #tpu.memory_space<vmem>>, vector<1x128xf32>
    %15 = vector.broadcast %14 : vector<1x128xf32> to vector<32x128xf32>
    %16 = arith.mulf %13, %15 : vector<32x128xf32>
    %17 = tpu.iota {dimensions = array<i32: 1>} : vector<1x128xi32>
    %c31_i32 = arith.constant 31 : i32
    %18 = vector.broadcast %c31_i32 : i32 to vector<1x128xi32>
    %19 = arith.andi %17, %18 : vector<1x128xi32>
    %c16_i32 = arith.constant 16 : i32
    %20 = vector.broadcast %c16_i32 : i32 to vector<1x128xi32>
    %21 = arith.cmpi sge, %19, %20 : vector<1x128xi32>
    %22 = arith.extui %21 : vector<1x128xi1> to vector<1x128xi32>
    %cst = arith.constant 0.636619746 : f32
    %23 = vector.broadcast %cst : f32 to vector<32x128xf32>
    %24 = arith.mulf %16, %23 : vector<32x128xf32>
    %cst_3 = arith.constant 5.000000e-01 : f32
    %25 = vector.broadcast %cst_3 : f32 to vector<32x128xf32>
    %26 = arith.addf %24, %25 : vector<32x128xf32>
    %27 = math.floor %26 : vector<32x128xf32>
    %cst_4 = arith.constant 1.5703125 : f32
    %28 = vector.broadcast %cst_4 : f32 to vector<32x128xf32>
    %29 = arith.mulf %27, %28 : vector<32x128xf32>
    %30 = arith.subf %16, %29 : vector<32x128xf32>
    %cst_5 = arith.constant 4.83751297E-4 : f32
    %31 = vector.broadcast %cst_5 : f32 to vector<32x128xf32>
    %32 = arith.mulf %27, %31 : vector<32x128xf32>
    %33 = arith.subf %30, %32 : vector<32x128xf32>
    %cst_6 = arith.constant 7.549790e-08 : f32
    %34 = vector.broadcast %cst_6 : f32 to vector<32x128xf32>
    %35 = arith.mulf %27, %34 : vector<32x128xf32>
    %36 = arith.subf %33, %35 : vector<32x128xf32>
    %37 = arith.fptosi %27 : vector<32x128xf32> to vector<32x128xi32>
    %38 = vector.broadcast %22 : vector<1x128xi32> to vector<32x128xi32>
    %39 = arith.addi %37, %38 : vector<32x128xi32>
    %40 = arith.mulf %36, %36 : vector<32x128xf32>
    %cst_7 = arith.constant -1.95152956E-4 : f32
    %41 = vector.broadcast %cst_7 : f32 to vector<32x128xf32>
    %42 = arith.mulf %41, %40 : vector<32x128xf32>
    %cst_8 = arith.constant 0.00833216123 : f32
    %43 = vector.broadcast %cst_8 : f32 to vector<32x128xf32>
    %44 = arith.addf %42, %43 : vector<32x128xf32>
    %45 = arith.mulf %44, %40 : vector<32x128xf32>
    %cst_9 = arith.constant -0.166666552 : f32
    %46 = vector.broadcast %cst_9 : f32 to vector<32x128xf32>
    %47 = arith.addf %45, %46 : vector<32x128xf32>
    %48 = arith.mulf %47, %40 : vector<32x128xf32>
    %49 = arith.mulf %48, %36 : vector<32x128xf32>
    %50 = arith.addf %49, %36 : vector<32x128xf32>
    %cst_10 = arith.constant 2.44331568E-5 : f32
    %51 = vector.broadcast %cst_10 : f32 to vector<32x128xf32>
    %52 = arith.mulf %51, %40 : vector<32x128xf32>
    %cst_11 = arith.constant -0.00138873165 : f32
    %53 = vector.broadcast %cst_11 : f32 to vector<32x128xf32>
    %54 = arith.addf %52, %53 : vector<32x128xf32>
    %55 = arith.mulf %54, %40 : vector<32x128xf32>
    %cst_12 = arith.constant 0.0416666456 : f32
    %56 = vector.broadcast %cst_12 : f32 to vector<32x128xf32>
    %57 = arith.addf %55, %56 : vector<32x128xf32>
    %58 = arith.mulf %40, %40 : vector<32x128xf32>
    %59 = arith.mulf %57, %58 : vector<32x128xf32>
    %cst_13 = arith.constant 5.000000e-01 : f32
    %60 = vector.broadcast %cst_13 : f32 to vector<32x128xf32>
    %61 = arith.mulf %60, %40 : vector<32x128xf32>
    %62 = arith.subf %59, %61 : vector<32x128xf32>
    %cst_14 = arith.constant 1.000000e+00 : f32
    %63 = vector.broadcast %cst_14 : f32 to vector<32x128xf32>
    %64 = arith.addf %62, %63 : vector<32x128xf32>
    %c1_i32 = arith.constant 1 : i32
    %65 = vector.broadcast %c1_i32 : i32 to vector<32x128xi32>
    %66 = arith.andi %39, %65 : vector<32x128xi32>
    %c1_i32_15 = arith.constant 1 : i32
    %67 = vector.broadcast %c1_i32_15 : i32 to vector<32x128xi32>
    %68 = arith.cmpi eq, %66, %67 : vector<32x128xi32>
    %c2_i32 = arith.constant 2 : i32
    %69 = vector.broadcast %c2_i32 : i32 to vector<32x128xi32>
    %70 = arith.andi %39, %69 : vector<32x128xi32>
    %c2_i32_16 = arith.constant 2 : i32
    %71 = vector.broadcast %c2_i32_16 : i32 to vector<32x128xi32>
    %72 = arith.cmpi eq, %70, %71 : vector<32x128xi32>
    %73 = arith.select %68, %64, %50 : vector<32x128xi1>, vector<32x128xf32>
    %cst_17 = arith.constant 0.000000e+00 : f32
    %74 = vector.broadcast %cst_17 : f32 to vector<32x128xf32>
    %75 = arith.subf %74, %73 : vector<32x128xf32>
    %76 = arith.select %72, %75, %73 : vector<32x128xi1>, vector<32x128xf32>
    %c0_18 = arith.constant 0 : index
    %c0_19 = arith.constant 0 : index
    %77 = vector.load %arg3[%c0_18, %c0_19] : memref<32x128xf32, #tpu.memory_space<vmem>>, vector<32x128xf32>
    tpu.vector_store %arg3[%c0_18, %c0_19], %76 {strides = array<i32>} : memref<32x128xf32, #tpu.memory_space<vmem>>, vector<32x128xf32>,
    return
  }
  func.func @transform_0(%arg0: i32) -> (i32, i32) {
    %c0_i32 = arith.constant 0 : i32
    %c0_i32_0 = arith.constant 0 : i32
    return %arg0, %c0_i32 : i32, i32
  }
  func.func @transform_1(%arg0: i32) -> (i32, i32) {
    %c0_i32 = arith.constant 0 : i32
    %c0_i32_0 = arith.constant 0 : i32
    %c0_i32_1 = arith.constant 0 : i32
    return %c0_i32, %c0_i32_0 : i32, i32
  }
  func.func @transform_2(%arg0: i32) -> (i32, i32) {
    %c0_i32 = arith.constant 0 : i32
    %c0_i32_0 = arith.constant 0 : i32
    return %arg0, %c0_i32 : i32, i32
  }
}

</mosaic_0001>

<llo_original>
// kernel: tpu_custom_call.1
$region0: #{tpu_custom_call.1}
  #allocation0 [shape = 'u32[]', space=smem, size = 0x4, offset = 0x4, fixed_abs, tag = 'smem constant byte address 0x4 - core index']
  #allocation1 [shape = 'u32[144,128]{1,0:T(1,128)}', space=vmem, size = 0x12000, scoped, tag = 'internal scratch']
  %s0 = inlined_call_operand.vmem [shape: f32[50,4], index: 0, kind: input, shape index: {}]
  %s1 = inlined_call_operand.vmem [shape: f32[1,128], index: 1, kind: input, shape index: {}]
  %s2 = inlined_call_operand.hbm [shape: f32[50,128], index: 2, kind: output, shape index: {}]
  %s3 = sld [smem:[#allocation0]]
  $region41: #{tpu_custom_call.1} parent=0
    _
  %s5 = ssub.s32 1, %s3
  %s6 = scalar_select 0, %s5, %s3
  $region1: #{tpu_custom_call.1} parent=0
    #allocation2 [shape = 'u8[32768]{0}', space=vmem, size = 0x8000, scoped, tag = 'output window, operand 0']
    #allocation3 [shape = 's32[2]{0}', space=sflag, size = 0x8, scoped, tag = 'scoped memory for tpu_custom_call.1']
    %7 = vsyncpa [#allocation3], 0
    %s8 = scalar_lea.sflag [#allocation3], 1
    %9 = vsyncpa %s8, 0
    loop: start=0, step=1, limit=4
    $region2: #{tpu_custom_call.1} parent=1 // loop_pre_header
      _
    $region3: #{tpu_custom_call.1} parent=1 // loop_header
      %s11 = sphi 0, %s15
      %p12 = scmp.ge.s32.totalorder %s11, 4
      %s21 = sphi 0, %s23
      %s24 = sphi 0, %s21
      %s25 = sphi 0, %s24
      %s41 = sphi 0, %s25
      %s45 = sphi 0, %s45
      %s47 = sphi 0, %s45
      %s48 = sphi 0, %s47
      %s62 = sphi 0, %s48
      %s68 = sphi 0, %s70
      %s71 = sphi 0, %s68
      %s72 = sphi 0, %s71
      %s88 = sphi 0, %s72
    $region4: #{tpu_custom_call.1} parent=1 // loop_header_branch
      %14 = sbr.rel (%p12) target = $region8
    $region5: #{tpu_custom_call.1} parent=1 // loop_body
      %s16 = ssub.s32 %s11, 1
      %s17 = ssub.s32 %s11, 2
      %s18 = sadd.s32 %s11, 1
      %s19 = ssub.s32 %s11, %s18
      %p20 = scmp.eq.s32.totalorder %s19, 0
      %s22 = sadd.s32 %s21, 1
      %s23 = scalar_select %p20, %s21, %s22
      %p26 = pneg %p20
      %p27 = scmp.eq.s32.totalorder %s11, 1
      %p28 = por %p26, %p27
      %p29 = scmp.ne.s32.totalorder %s21, %s24
      %p30 = scmp.eq.s32.totalorder %s11, 0
      %p31 = por %p29, %p30
      %p32 = scmp.ne.s32.totalorder %s21, %s24
      %p33 = scmp.eq.s32.totalorder %s16, 1
      %p34 = por %p32, %p33
      %p35 = scmp.ne.s32.totalorder %s24, %s25
      %p36 = scmp.eq.s32.totalorder %s16, 0
      %p37 = por %p35, %p36
      %p38 = scmp.ne.s32.totalorder %s24, %s25
      %p39 = scmp.eq.s32.totalorder %s17, 1
      %p40 = por %p38, %p39
      %p42 = scmp.ne.s32.totalorder %s25, %s41
      %p43 = scmp.eq.s32.totalorder %s17, 0
      %p44 = por %p42, %p43
      %s46 = sadd.s32 %s45, 1
      %p49 = scmp.eq.s32.totalorder %s11, 1
      %p50 = scmp.ne.s32.totalorder %s45, %s47
      %p51 = scmp.eq.s32.totalorder %s11, 0
      %p52 = por %p50, %p51
      %p53 = scmp.ne.s32.totalorder %s45, %s47
      %p54 = scmp.eq.s32.totalorder %s16, 1
      %p55 = por %p53, %p54
      %p56 = scmp.ne.s32.totalorder %s47, %s48
      %p57 = scmp.eq.s32.totalorder %s16, 0
      %p58 = por %p56, %p57
      %p59 = scmp.ne.s32.totalorder %s47, %s48
      %p60 = scmp.eq.s32.totalorder %s17, 1
      %p61 = por %p59, %p60
      %p63 = scmp.ne.s32.totalorder %s48, %s62
      %p64 = scmp.eq.s32.totalorder %s17, 0
      %p65 = por %p63, %p64
      %s66 = ssub.s32 %s11, %s18
      %p67 = scmp.eq.s32.totalorder %s66, 0
      %s69 = sadd.s32 %s68, 1
      %s70 = scalar_select %p67, %s68, %s69
      %p73 = pneg %p67
      %p74 = scmp.eq.s32.totalorder %s11, 1
      %p75 = por %p73, %p74
      %p76 = scmp.ne.s32.totalorder %s68, %s71
      %p77 = scmp.eq.s32.totalorder %s11, 0
      %p78 = por %p76, %p77
      %p79 = scmp.ne.s32.totalorder %s68, %s71
      %p80 = scmp.eq.s32.totalorder %s16, 1
      %p81 = por %p79, %p80
      %p82 = scmp.ne.s32.totalorder %s71, %s72
      %p83 = scmp.eq.s32.totalorder %s16, 0
      %p84 = por %p82, %p83
      %p85 = scmp.ne.s32.totalorder %s71, %s72
      %p86 = scmp.eq.s32.totalorder %s17, 1
      %p87 = por %p85, %p86
      %p89 = scmp.ne.s32.totalorder %s72, %s88
      %p90 = scmp.eq.s32.totalorder %s17, 0
      %p91 = por %p89, %p90
      %p92 = scmp.le.s32.totalorder 1, %s11
      %p93 = scmp.lt.s32.totalorder %s11, 3
      %p94 = pnand %p92, %p93
      %p95 = pneg %p94
      // Predicated region
      $region9: #{tpu_custom_call.1} parent=5 // pred_check
        _
      $region10: #{tpu_custom_call.1} parent=5 // pred_check_branch
        %97 = sbr.rel (%p94) target = $region12
      $region11: #{tpu_custom_call.1} parent=5 // pred_region
        %s98 = ssub.s32 %s11, 1
        // Predicated region
        $region13: #{tpu_custom_call.1} parent=11 // pred_check
          %p99 = pneg %p58
        $region14: #{tpu_custom_call.1} parent=11 // pred_check_branch
          %101 = sbr.rel (%p99) target = $region16
        $region15: #{tpu_custom_call.1} parent=11 // pred_region
          _
        $region16: #{tpu_custom_call.1} parent=11 // pred_fallthru
          _
      $region12: #{tpu_custom_call.1} parent=5 // pred_fallthru
        _
      %p102 = scmp.lt.s32.totalorder %s11, 2
      // Predicated region
      $region17: #{tpu_custom_call.1} parent=5 // pred_check
        %p103 = pneg %p102
      $region18: #{tpu_custom_call.1} parent=5 // pred_check_branch
        %105 = sbr.rel (%p103) target = $region20
      $region19: #{tpu_custom_call.1} parent=5 // pred_region
        // Predicated region
        $region21: #{tpu_custom_call.1} parent=19 // pred_check
          %p106 = pneg %p31
        $region22: #{tpu_custom_call.1} parent=19 // pred_check_branch
          %108 = sbr.rel (%p106) target = $region24
        $region23: #{tpu_custom_call.1} parent=19 // pred_region
          %s109 = smul.u32 4, %s11
          %s110 = ssub.s32 7, %s109
          %p111 = scmp.lt.s32.totalorder %s110, 4
          %s112 = scalar_select %p111, %s110, 4
          %s113 = smul.u32 128, %s112
          %p114 = scmp.lt.s32.totalorder %s109, 6
          %s115 = scalar_select %p114, %s109, 6
          %s116 = smul.addr %s115, 8
          %s117 = scalar_lea.vmem %s0, %s116
          %s118 = smul.u32 4, %s11
          %s119 = ssub.s32 7, %s118
          %p120 = scmp.lt.s32.totalorder %s119, 4
          %s121 = scalar_select %p120, %s119, 4
          %s122 = smul.u32 128, %s121
        $region24: #{tpu_custom_call.1} parent=19 // pred_fallthru
          _
      $region20: #{tpu_custom_call.1} parent=5 // pred_fallthru
        _
      %p123 = scmp.le.s32.totalorder 1, %s11
      %p124 = scmp.lt.s32.totalorder %s11, 3
      %p125 = pnand %p123, %p124
      %p126 = pneg %p125
      // Predicated region
      $region25: #{tpu_custom_call.1} parent=5 // pred_check
        _
      $region26: #{tpu_custom_call.1} parent=5 // pred_check_branch
        %128 = sbr.rel (%p125) target = $region28
      $region27: #{tpu_custom_call.1} parent=5 // pred_region
        %s129 = ssub.s32 %s11, 1
        %s130 = smul.u32 4, %s16
        %s131 = ssub.s32 7, %s130
        %p132 = scmp.lt.s32.totalorder %s131, 4
        %s133 = scalar_select %p132, %s131, 4
        %s134 = smul.u32 128, %s133
        %p135 = scmp.lt.s32.totalorder %s130, 6
        %s136 = scalar_select %p135, %s130, 6
        %s137 = smul.addr %s136, 8
        %s138 = scalar_lea.vmem %s0, %s137
        %p139 = pneg %p37
        %p140 = pneg %p34
        %p141 = pneg %p58
        %p142 = pneg %p55
        %p143 = pneg %p84
        %p144 = pneg %p81
        %s145 = sand.u32 %s71, 1
        %s146 = scalar_lea.sflag [#allocation3], %s145
        %s147 = sand.u32 %s71, 1
        %s148 = smul.addr %s147, 32
        %s149 = scalar_lea.vmem [#allocation2], %s148
        %s150 = smul.u32 4, %s16
        %s151 = ssub.s32 7, %s150
        %p152 = scmp.lt.s32.totalorder %s151, 4
        %s153 = scalar_select %p152, %s151, 4
        %s154 = smul.u32 128, %s153
        %p155 = scmp.lt.s32.totalorder %s150, 6
        %s156 = scalar_select %p155, %s150, 6
        %s157 = smul.addr %s156, 8
        %s158 = scalar_lea.vmem %s0, %s157
        %s159 = smul.u32 4, %s16
        %s160 = ssub.s32 7, %s159
        %p161 = scmp.lt.s32.totalorder %s160, 4
        %s162 = scalar_select %p161, %s160, 4
        %s163 = smul.u32 128, %s162
        %s164 = smul.u32 4, %s16
        %s165 = ssub.s32 7, %s164
        %p166 = scmp.lt.s32.totalorder %s165, 4
        %s167 = scalar_select %p166, %s165, 4
        %s168 = smul.u32 128, %s167
        %v169 = vld [vmem:[%s158] sm:$0xff]
        %v170 = vld [vmem:[%s158 + $0x8] sm:$0xff]
        %v171 = vld [vmem:[%s158 + $0x10] sm:$0xff]
        %v172 = vld [vmem:[%s158 + $0x18] sm:$0xff]
        %174 = vset.pattern.permute.xlu0 0
        %175 = vperm.xlu0 %174, %v169
        %v176 = vpop.permute.xlu0 %175
        %179 = vset.pattern.permute.xlu0 0
        %180 = vperm.xlu0 %179, %v170
        %v181 = vpop.permute.xlu0 %180
        %184 = vset.pattern.permute.xlu0 0
        %185 = vperm.xlu0 %184, %v171
        %v186 = vpop.permute.xlu0 %185
        %189 = vset.pattern.permute.xlu0 0
        %190 = vperm.xlu0 %189, %v172
        %v191 = vpop.permute.xlu0 %190
        %193 = vset.pattern.permute.xlu0 1
        %194 = vperm.xlu0 %193, %v169
        %v195 = vpop.permute.xlu0 %194
        %197 = vset.pattern.permute.xlu0 1
        %198 = vperm.xlu0 %197, %v170
        %v199 = vpop.permute.xlu0 %198
        %201 = vset.pattern.permute.xlu0 1
        %202 = vperm.xlu0 %201, %v171
        %v203 = vpop.permute.xlu0 %202
        %205 = vset.pattern.permute.xlu0 1
        %206 = vperm.xlu0 %205, %v172
        %v207 = vpop.permute.xlu0 %206
        %209 = vset.pattern.permute.xlu0 2
        %210 = vperm.xlu0 %209, %v169
        %v211 = vpop.permute.xlu0 %210
        %213 = vset.pattern.permute.xlu0 2
        %214 = vperm.xlu0 %213, %v170
        %v215 = vpop.permute.xlu0 %214
        %217 = vset.pattern.permute.xlu0 2
        %218 = vperm.xlu0 %217, %v171
        %v219 = vpop.permute.xlu0 %218
        %221 = vset.pattern.permute.xlu0 2
        %222 = vperm.xlu0 %221, %v172
        %v223 = vpop.permute.xlu0 %222
        %225 = vset.pattern.permute.xlu0 3
        %226 = vperm.xlu0 %225, %v169
        %v227 = vpop.permute.xlu0 %226
        %229 = vset.pattern.permute.xlu0 3
        %230 = vperm.xlu0 %229, %v170
        %v231 = vpop.permute.xlu0 %230
        %233 = vset.pattern.permute.xlu0 3
        %234 = vperm.xlu0 %233, %v171
        %v235 = vpop.permute.xlu0 %234
        %237 = vset.pattern.permute.xlu0 3
        %238 = vperm.xlu0 %237, %v172
        %v239 = vpop.permute.xlu0 %238
        %vm241 = vcmask 261120
        %v242 = vsel %vm241, %v176, %v195
        %v243 = vsel %vm241, %v181, %v199
        %v244 = vsel %vm241, %v186, %v203
        %v245 = vsel %vm241, %v191, %v207
        %vm246 = vcmask 523264
        %v247 = vsel %vm246, %v242, %v211
        %v248 = vsel %vm246, %v243, %v215
        %v249 = vsel %vm246, %v244, %v219
        %v250 = vsel %vm246, %v245, %v223
        %vm251 = vcmask 785408
        %v252 = vsel %vm251, %v247, %v227
        %v253 = vsel %vm251, %v248, %v231
        %v254 = vsel %vm251, %v249, %v235
        %v255 = vsel %vm251, %v250, %v239
        %v256 = vld [vmem:[%s1] sm:$0x1]
        %v258 = vlaneseq
        %v259 = vshrl.u32 %v258, 7
        %v260 = vsub.s32 0, %v259
        %v261 = vrot.slane %v256, %v260
        %v263 = vmul.f32 %v252, %v261
        %v264 = vmul.f32 %v253, %v261
        %v265 = vmul.f32 %v254, %v261
        %v266 = vmul.f32 %v255, %v261
        %v267 = vlaneseq
        %v268 = vand.u32 %v267, 127
        %v269 = vand.u32 %v268, 31
        %vm270 = vcmp.ge.s32.totalorder %v269, 16
        %v271 = vsel %vm270, 1, 0
        %v272 = vmul.f32 %v263, 0.63661975
        %v273 = vmul.f32 %v264, 0.63661975
        %v274 = vmul.f32 %v265, 0.63661975
        %v275 = vmul.f32 %v266, 0.63661975
        %v276 = vadd.f32 %v272, 0.5
        %v277 = vadd.f32 %v273, 0.5
        %v278 = vadd.f32 %v274, 0.5
        %v279 = vadd.f32 %v275, 0.5
        %v280 = vfloor.f32 %v276
        %v281 = vfloor.f32 %v277
        %v282 = vfloor.f32 %v278
        %v283 = vfloor.f32 %v279
        %v284 = vmul.f32 %v280, 1.5703125
        %v285 = vmul.f32 %v281, 1.5703125
        %v286 = vmul.f32 %v282, 1.5703125
        %v287 = vmul.f32 %v283, 1.5703125
        %v288 = vsub.f32 %v263, %v284
        %v289 = vsub.f32 %v264, %v285
        %v290 = vsub.f32 %v265, %v286
        %v291 = vsub.f32 %v266, %v287
        %v292 = vmul.f32 %v280, 0.0004837513
        %v293 = vmul.f32 %v281, 0.0004837513
        %v294 = vmul.f32 %v282, 0.0004837513
        %v295 = vmul.f32 %v283, 0.0004837513
        %v296 = vsub.f32 %v288, %v292
        %v297 = vsub.f32 %v289, %v293
        %v298 = vsub.f32 %v290, %v294
        %v299 = vsub.f32 %v291, %v295
        %v300 = vmul.f32 %v280, 7.54979e-08
        %v301 = vmul.f32 %v281, 7.54979e-08
        %v302 = vmul.f32 %v282, 7.54979e-08
        %v303 = vmul.f32 %v283, 7.54979e-08
        %v304 = vsub.f32 %v296, %v300
        %v305 = vsub.f32 %v297, %v301
        %v306 = vsub.f32 %v298, %v302
        %v307 = vsub.f32 %v299, %v303
        %v308 = vcvt.f32.s32.to.zero.pseudo %v280
        %v309 = vcvt.f32.s32.to.zero.pseudo %v281
        %v310 = vcvt.f32.s32.to.zero.pseudo %v282
        %v311 = vcvt.f32.s32.to.zero.pseudo %v283
        %v312 = vadd.s32 %v308, %v271
        %v313 = vadd.s32 %v309, %v271
        %v314 = vadd.s32 %v310, %v271
        %v315 = vadd.s32 %v311, %v271
        %v316 = vmul.f32 %v304, %v304
        %v317 = vmul.f32 %v305, %v305
        %v318 = vmul.f32 %v306, %v306
        %v319 = vmul.f32 %v307, %v307
        %v320 = vmul.f32 %v316, -0.00019515296
        %v321 = vmul.f32 %v317, -0.00019515296
        %v322 = vmul.f32 %v318, -0.00019515296
        %v323 = vmul.f32 %v319, -0.00019515296
        %v324 = vadd.f32 %v320, 0.008332161
        %v325 = vadd.f32 %v321, 0.008332161
        %v326 = vadd.f32 %v322, 0.008332161
        %v327 = vadd.f32 %v323, 0.008332161
        %v328 = vmul.f32 %v324, %v316
        %v329 = vmul.f32 %v325, %v317
        %v330 = vmul.f32 %v326, %v318
        %v331 = vmul.f32 %v327, %v319
        %v332 = vadd.f32 %v328, -0.16666655
        %v333 = vadd.f32 %v329, -0.16666655
        %v334 = vadd.f32 %v330, -0.16666655
        %v335 = vadd.f32 %v331, -0.16666655
        %v336 = vmul.f32 %v332, %v316
        %v337 = vmul.f32 %v333, %v317
        %v338 = vmul.f32 %v334, %v318
        %v339 = vmul.f32 %v335, %v319
        %v340 = vmul.f32 %v336, %v304
        %v341 = vmul.f32 %v337, %v305
        %v342 = vmul.f32 %v338, %v306
        %v343 = vmul.f32 %v339, %v307
        %v344 = vadd.f32 %v340, %v304
        %v345 = vadd.f32 %v341, %v305
        %v346 = vadd.f32 %v342, %v306
        %v347 = vadd.f32 %v343, %v307
        %v348 = vmul.f32 %v316, 2.4433157e-05
        %v349 = vmul.f32 %v317, 2.4433157e-05
        %v350 = vmul.f32 %v318, 2.4433157e-05
        %v351 = vmul.f32 %v319, 2.4433157e-05
        %v352 = vadd.f32 %v348, -0.0013887316
        %v353 = vadd.f32 %v349, -0.0013887316
        %v354 = vadd.f32 %v350, -0.0013887316
        %v355 = vadd.f32 %v351, -0.0013887316
        %v356 = vmul.f32 %v352, %v316
        %v357 = vmul.f32 %v353, %v317
        %v358 = vmul.f32 %v354, %v318
        %v359 = vmul.f32 %v355, %v319
        %v360 = vadd.f32 %v356, 0.041666646
        %v361 = vadd.f32 %v357, 0.041666646
        %v362 = vadd.f32 %v358, 0.041666646
        %v363 = vadd.f32 %v359, 0.041666646
        %v364 = vmul.f32 %v316, %v316
        %v365 = vmul.f32 %v317, %v317
        %v366 = vmul.f32 %v318, %v318
        %v367 = vmul.f32 %v319, %v319
        %v368 = vmul.f32 %v360, %v364
        %v369 = vmul.f32 %v361, %v365
        %v370 = vmul.f32 %v362, %v366
        %v371 = vmul.f32 %v363, %v367
        %v372 = vmul.f32 %v316, 0.5
        %v373 = vmul.f32 %v317, 0.5
        %v374 = vmul.f32 %v318, 0.5
        %v375 = vmul.f32 %v319, 0.5
        %v376 = vsub.f32 %v368, %v372
        %v377 = vsub.f32 %v369, %v373
        %v378 = vsub.f32 %v370, %v374
        %v379 = vsub.f32 %v371, %v375
        %v380 = vadd.f32 %v376, 1.0
        %v381 = vadd.f32 %v377, 1.0
        %v382 = vadd.f32 %v378, 1.0
        %v383 = vadd.f32 %v379, 1.0
        %v384 = vand.u32 %v312, 1
        %v385 = vand.u32 %v313, 1
        %v386 = vand.u32 %v314, 1
        %v387 = vand.u32 %v315, 1
        %vm388 = vcmp.eq.s32.totalorder %v384, 1
        %vm389 = vcmp.eq.s32.totalorder %v385, 1
        %vm390 = vcmp.eq.s32.totalorder %v386, 1
        %vm391 = vcmp.eq.s32.totalorder %v387, 1
        %v392 = vand.u32 %v312, 2
        %v393 = vand.u32 %v313, 2
        %v394 = vand.u32 %v314, 2
        %v395 = vand.u32 %v315, 2
        %vm396 = vcmp.eq.s32.totalorder %v392, 2
        %vm397 = vcmp.eq.s32.totalorder %v393, 2
        %vm398 = vcmp.eq.s32.totalorder %v394, 2
        %vm399 = vcmp.eq.s32.totalorder %v395, 2
        %v400 = vsel %vm388, %v380, %v344
        %v401 = vsel %vm389, %v381, %v345
        %v402 = vsel %vm390, %v382, %v346
        %v403 = vsel %vm391, %v383, %v347
        %v404 = vsub.f32 0.0, %v400
        %v405 = vsub.f32 0.0, %v401
        %v406 = vsub.f32 0.0, %v402
        %v407 = vsub.f32 0.0, %v403
        %v408 = vsel %vm396, %v404, %v400
        %v409 = vsel %vm397, %v405, %v401
        %v410 = vsel %vm398, %v406, %v402
        %v411 = vsel %vm399, %v407, %v403
        %412 = vst [vmem:[%s149] sm:$0xff] %v408
        %413 = vst [vmem:[%s149 + $0x8] sm:$0xff] %v409
        %414 = vst [vmem:[%s149 + $0x10] sm:$0xff] %v410
        %415 = vst [vmem:[%s149 + $0x18] sm:$0xff] %v411
        %s416 = sand.u32 %s71, 1
        %s417 = scalar_lea.sflag [#allocation3], %s416
        %s418 = sand.u32 %s71, 1
        %s419 = smul.addr %s418, 32
        %s420 = scalar_lea.vmem [#allocation2], %s419
        // Predicated region
        $region29: #{tpu_custom_call.1} parent=27 // pred_check
          %p421 = pneg %p81
        $region30: #{tpu_custom_call.1} parent=27 // pred_check_branch
          %423 = sbr.rel (%p421) target = $region32
        $region31: #{tpu_custom_call.1} parent=27 // pred_region
          %s424 = smul.u32 4, %s16
          %s425 = ssub.s32 7, %s424
          %p426 = scmp.lt.s32.totalorder %s425, 4
          %s427 = scalar_select %p426, %s425, 4
          %s428 = smul.u32 128, %s427
          %s430 = ssub.s32 512, %s428
          %431 = vsyncadd %s417, %s430
          %p432 = scmp.ne.s32.totalorder 0, %s428
          %s433 = smul.addr %s424, 128
          %s434 = scalar_lea.hbm %s2, %s433
          %s435 = smul.u32 8, %s427
          %s436 = sshll.u32 %s420, 4
          %s437 = int_to_ptr.vmem [resolvable:$true] %s436
          %s438 = sshll.u32 %s435, 4
          %442 = dma.vmem_to_hbm [thread:$0]  (%p432), %s437, %s438, %s434, %s417, 128, 128, 8
        $region32: #{tpu_custom_call.1} parent=27 // pred_fallthru
          _
      $region28: #{tpu_custom_call.1} parent=5 // pred_fallthru
        _
      %p443 = scmp.le.s32.totalorder 2, %s11
      // Predicated region
      $region33: #{tpu_custom_call.1} parent=5 // pred_check
        %p444 = pneg %p443
      $region34: #{tpu_custom_call.1} parent=5 // pred_check_branch
        %446 = sbr.rel (%p444) target = $region36
      $region35: #{tpu_custom_call.1} parent=5 // pred_region
        %s447 = ssub.s32 %s11, 2
        // Predicated region
        $region37: #{tpu_custom_call.1} parent=35 // pred_check
          %p448 = pneg %p87
        $region38: #{tpu_custom_call.1} parent=35 // pred_check_branch
          %450 = sbr.rel (%p448) target = $region40
        $region39: #{tpu_custom_call.1} parent=35 // pred_region
          %s451 = sand.u32 %s72, 1
          %s452 = scalar_lea.sflag [#allocation3], %s451
          %s453 = sand.u32 %s72, 1
          %s454 = smul.addr %s453, 32
          %s455 = scalar_lea.vmem [#allocation2], %s454
          %456 = dma.done %s452, 512
        $region40: #{tpu_custom_call.1} parent=35 // pred_fallthru
          _
      $region36: #{tpu_custom_call.1} parent=5 // pred_fallthru
        _
    $region6: #{tpu_custom_call.1} parent=1 // loop_footer
      %s15 = sadd.s32 1, %s11
    $region7: #{tpu_custom_call.1} parent=1 // loop_footer_branch
      %10 = sbr.rel target = $region3
    $region8: #{tpu_custom_call.1} parent=1 // loop_exit
      _
    %457 = vsyncpa [#allocation3], 1
    %s458 = scalar_lea.sflag [#allocation3], 1
    %459 = vsyncpa %s458, 1

</llo_original>
